<compile_context>
chip_gen: v6e
topology: v6e:2x2x1
jax: 0.10.0
libtpu: 0.0.40
codegen_flags: <defaults>
</compile_context>

<pallas_src>
import jax
import jax.numpy as jnp
from jax.experimental import pallas as pl
from jax.experimental.pallas import tpu as pltpu


def _mha_kernel(q_ref, kv_ref, mask_ref,
                w_w_ref, b_w_ref, w_ctx_ref, w_q_ref, b_q_ref, w_v_ref, b_v_ref,
                ctx_ref, attn_ref):
    """All heads of MHAttention for one batch tile."""
    TB, L, KV = kv_ref.shape
    MFC, HD = w_v_ref.shape
    CTX = ctx_ref.shape[-1]

    kv2d = kv_ref[...].reshape(TB * L, KV)       # big-M operand for the MXU
    masked = mask_ref[...] != 0                  # (TB, L)  True = masked out

    # --- three wide MXU matmuls cover every head at once -------------------
    # head_kv_all[:, h*HD:(h+1)*HD] == kv @ W_w[h] + b_w[h]
    head_kv = jnp.dot(kv2d, w_w_ref[...],
                      preferred_element_type=jnp.float32) + b_w_ref[...]   # (TB*L, CTX)
    # uh_all = head_kv_all @ blockdiag(W_ctx)  -> per-head Linear(hd, hd)
    uh = jnp.dot(head_kv, w_ctx_ref[...],
                 preferred_element_type=jnp.float32)                       # (TB*L, CTX)
    # wq_all[:, h*HD:(h+1)*HD] == q @ W_q[h] + b_q[h]
    wq = jnp.dot(q_ref[...], w_q_ref[...],
                 preferred_element_type=jnp.float32) + b_q_ref[...]        # (TB, CTX)

    wquh = jnp.tanh(uh.reshape(TB, L, CTX) + wq[:, None, :])               # (TB, L, CTX)
    head_kv3 = head_kv.reshape(TB, L, CTX)

    # --- cheap per-head tail (score, masked softmax, weighted sum) ---------
    ctx_parts = []
    attn_max = None
    for h in range(MFC):                        # mfc is small & static -> unrolled
        lo = h * HD
        wv = w_v_ref[h:h + 1, :]                                           # (1, HD)
        s = jnp.sum(wquh[:, :, lo:lo + HD] * wv[None, :, :], axis=-1)      # (TB, L)
        s = s + b_v_ref[h:h + 1, :]
        s = jnp.where(masked, -jnp.inf, s)
        m = jnp.max(s, axis=-1, keepdims=True)
        e = jnp.exp(s - m)
        attn = e / jnp.sum(e, axis=-1, keepdims=True)                      # (TB, L)
        ctx_h = jnp.sum(attn[:, :, None] * head_kv3[:, :, lo:lo + HD], axis=1)  # (TB, HD)
        ctx_parts.append(ctx_h)
        attn_max = attn if attn_max is None else jnp.maximum(attn_max, attn)

    # One lane-dense store per output (no per-head / per-row partial stores).
    ctx_ref[...] = jnp.concatenate(ctx_parts, axis=-1).astype(ctx_ref.dtype)
    attn_ref[...] = attn_max.astype(attn_ref.dtype)


@jax.jit
def mh_attention_forward(q, kv, kv_mask, w_w, b_w, w_ctx, w_q, b_q, w_v, b_v):
    """q:(B,q_dim) f32, kv:(B,L,kv_dim) f32, kv_mask:(B,L) bool (True = masked).

    Per-head parameters are stacked on a leading mfc axis, stored
    (in_features, out_features):
      w_w:(mfc,kv_dim,hd)  b_w:(mfc,hd)  w_ctx:(mfc,hd,hd)
      w_q:(mfc,q_dim,hd)   b_q:(mfc,hd)  w_v:(mfc,hd)  b_v:(mfc,)
    Returns (ctx:(B, mfc*hd), attn:(B, L)).
    """
    B, L, KV = kv.shape
    QD = q.shape[-1]
    MFC, _, HD = w_w.shape
    CTX = MFC * HD

    # Batch tiling: one grid step handles up to 128 examples so matmuls have
    # M = TB*L rows; batch-tile axis is "parallel" (megacore / v7x 2-TC split).
    TB = B if B <= 128 else 128
    grid = (pl.cdiv(B, TB),)

    # Pre-fold per-head weights into wide operands (tiny, fuses in XLA):
    #   column ordering is h*HD + d for every folded matrix/bias.
    w_w_cat = jnp.transpose(w_w, (1, 0, 2)).reshape(KV, CTX)
    b_w_cat = b_w.reshape(1, CTX)
    w_q_cat = jnp.transpose(w_q, (1, 0, 2)).reshape(QD, CTX)
    b_q_cat = b_q.reshape(1, CTX)
    w_ctx_bd = jnp.einsum("hg,hij->higj",
                          jnp.eye(MFC, dtype=w_ctx.dtype), w_ctx).reshape(CTX, CTX)
    b_v2 = b_v.reshape(MFC, 1)
    mask_i32 = kv_mask.astype(jnp.int32)

    flops = 2 * B * (L * KV * CTX + L * CTX * CTX + QD * CTX + 3 * L * CTX)
    transcendentals = B * L * (CTX + MFC)            # tanh + exp
    bytes_accessed = 4 * (B * (QD + L * KV + L + CTX + L)
                          + KV * CTX + CTX + CTX * CTX + QD * CTX + CTX
                          + MFC * HD + MFC)

    return pl.pallas_call(
        _mha_kernel,
        out_shape=(jax.ShapeDtypeStruct((B, CTX), jnp.float32),
                   jax.ShapeDtypeStruct((B, L), jnp.float32)),
        grid=grid,
        in_specs=[
            pl.BlockSpec((TB, QD), lambda b: (b, 0)),           # q
            pl.BlockSpec((TB, L, KV), lambda b: (b, 0, 0)),     # kv
            pl.BlockSpec((TB, L), lambda b: (b, 0)),            # kv_mask
            pl.BlockSpec((KV, CTX), lambda b: (0, 0)),          # W_w (all heads)
            pl.BlockSpec((1, CTX), lambda b: (0, 0)),           # b_w (all heads)
            pl.BlockSpec((CTX, CTX), lambda b: (0, 0)),         # W_ctx block-diag
            pl.BlockSpec((QD, CTX), lambda b: (0, 0)),          # W_q (all heads)
            pl.BlockSpec((1, CTX), lambda b: (0, 0)),           # b_q (all heads)
            pl.BlockSpec((MFC, HD), lambda b: (0, 0)),          # w_v
            pl.BlockSpec((MFC, 1), lambda b: (0, 0)),           # b_v
        ],
        out_specs=(pl.BlockSpec((TB, CTX), lambda b: (b, 0)),
                   pl.BlockSpec((TB, L), lambda b: (b, 0))),
        compiler_params=pltpu.CompilerParams(
            dimension_semantics=("parallel",)),
        cost_estimate=pl.CostEstimate(flops=flops,
                                      transcendentals=transcendentals,
                                      bytes_accessed=bytes_accessed),
    )(q, kv, mask_i32, w_w_cat, b_w_cat, w_ctx_bd, w_q_cat, b_q_cat, w_v, b_v2)


def _ref_forward(q, kv, kv_mask, w_w, b_w, w_ctx, w_q, b_q, w_v, b_v):
    """Pure-JAX reference mirroring the PyTorch forward."""
    hi = jax.lax.Precision.HIGHEST
    mfc = w_w.shape[0]
    ctxs, attns = [], []
    for h in range(mfc):
        head_kv = jnp.einsum("blk,kd->bld", kv, w_w[h], precision=hi) + b_w[h]
        uh = jnp.einsum("bld,de->ble", head_kv, w_ctx[h], precision=hi)
        wq = jnp.einsum("bk,kd->bd", q, w_q[h], precision=hi) + b_q[h]
        wquh = jnp.tanh(wq[:, None, :] + uh)
        scores = jnp.einsum("bld,d->bl", wquh, w_v[h], precision=hi) + b_v[h]
        scores = jnp.where(kv_mask, -jnp.inf, scores)
        attn = jax.nn.softmax(scores, axis=-1)
        ctxs.append(jnp.einsum("bl,bld->bd", attn, head_kv, precision=hi))
        attns.append(attn)
    return jnp.concatenate(ctxs, axis=-1), jnp.max(jnp.stack(attns, axis=1), axis=1)


if __name__ == "__main__":
    key = jax.random.PRNGKey(0)
    (k_q, k_kv, k_mask, k_ww, k_bw, k_wctx, k_wq, k_bq, k_wv, k_bv) = \
        jax.random.split(key, 10)

    # Small shapes consistent with the module: q_dim=32, kv_dim=32, mfc=2 heads
    # (head_dim=16), batch=4, kv sequence length L=8.
    B, L = 4, 8
    Q_DIM, KV_DIM, MFC = 32, 32, 2
    HD = KV_DIM // MFC

    q = jax.random.normal(k_q, (B, Q_DIM), jnp.float32)
    kv = jax.random.normal(k_kv, (B, L, KV_DIM), jnp.float32)
    kv_mask = jax.random.bernoulli(k_mask, 0.3, (B, L))
    kv_mask = kv_mask.at[:, 0].set(False)      # keep >=1 visible kv per row

    def _init(k, shape, fan_in):
        return jax.random.normal(k, shape, jnp.float32) / jnp.sqrt(float(fan_in))

    # Stacked per-head parameters (nn.Linear weights pre-transposed to (in, out)).
    w_w = _init(k_ww, (MFC, KV_DIM, HD), KV_DIM)
    b_w = 0.1 * jax.random.normal(k_bw, (MFC, HD), jnp.float32)
    w_ctx = _init(k_wctx, (MFC, HD, HD), HD)
    w_q = _init(k_wq, (MFC, Q_DIM, HD), Q_DIM)
    b_q = 0.1 * jax.random.normal(k_bq, (MFC, HD), jnp.float32)
    w_v = _init(k_wv, (MFC, HD), HD)           # Linear(head_dim, 1) weight row
    b_v = 0.1 * jax.random.normal(k_bv, (MFC,), jnp.float32)

    ctx, attn = mh_attention_forward(q, kv, kv_mask,
                                     w_w, b_w, w_ctx, w_q, b_q, w_v, b_v)
    ctx, attn = jax.block_until_ready((ctx, attn))

    ctx_ref, attn_ref = _ref_forward(q, kv, kv_mask,
                                     w_w, b_w, w_ctx, w_q, b_q, w_v, b_v)
    assert ctx.shape == (B, MFC * HD), ctx.shape
    assert attn.shape == (B, L), attn.shape
    assert jnp.allclose(ctx, ctx_ref, atol=1e-3, rtol=1e-3), \
        float(jnp.max(jnp.abs(ctx - ctx_ref)))
    assert jnp.allclose(attn, attn_ref, atol=1e-3, rtol=1e-3), \
        float(jnp.max(jnp.abs(attn - attn_ref)))

    # TODO(synk): PyTorch's .squeeze() degenerate behavior for B==1 or L==1 is
    # not reproduced; the kernel keeps explicit (B, ...) shapes.
    print("KERNEL_OK")
</pallas_src>

<mosaic_0001>
module attributes {stable_mosaic.version = 11 : i64} {
  func.func @_mha_kernel(%arg0: i32, %arg1: memref<4x32xf32, #tpu.memory_space<vmem>>, %arg2: memref<4x8x32xf32, #tpu.memory_space<vmem>>, %arg3: memref<4x8xi32, #tpu.memory_space<vmem>>, %arg4: memref<32x32xf32, #tpu.memory_space<vmem>>, %arg5: memref<1x32xf32, #tpu.memory_space<vmem>>, %arg6: memref<32x32xf32, #tpu.memory_space<vmem>>, %arg7: memref<32x32xf32, #tpu.memory_space<vmem>>, %arg8: memref<1x32xf32, #tpu.memory_space<vmem>>, %arg9: memref<2x16xf32, #tpu.memory_space<vmem>>, %arg10: memref<2x1xf32, #tpu.memory_space<vmem>>, %arg11: memref<4x32xf32, #tpu.memory_space<vmem>>, %arg12: memref<4x8xf32, #tpu.memory_space<vmem>>) attributes {dimension_semantics = [#tpu.dimension_semantics<parallel>], iteration_bounds = array<i64: 1>, scalar_prefetch = 0 : i64, scratch_operands = 0 : i64, tpu.core_type = #tpu.core_type<tc>, window_params = [{transform_indices = @transform_0, window_bounds = array<i64: 4, 32>}, {transform_indices = @transform_1, window_bounds = array<i64: 4, 8, 32>}, {transform_indices = @transform_2, window_bounds = array<i64: 4, 8>}, {pipeline_mode = #tpu.pipeline_mode<synchronous>, transform_indices = @transform_3, window_bounds = array<i64: 32, 32>}, {pipeline_mode = #tpu.pipeline_mode<synchronous>, transform_indices = @transform_4, window_bounds = array<i64: 1, 32>}, {pipeline_mode = #tpu.pipeline_mode<synchronous>, transform_indices = @transform_5, window_bounds = array<i64: 32, 32>}, {pipeline_mode = #tpu.pipeline_mode<synchronous>, transform_indices = @transform_6, window_bounds = array<i64: 32, 32>}, {pipeline_mode = #tpu.pipeline_mode<synchronous>, transform_indices = @transform_7, window_bounds = array<i64: 1, 32>}, {pipeline_mode = #tpu.pipeline_mode<synchronous>, transform_indices = @transform_8, window_bounds = array<i64: 2, 16>}, {pipeline_mode = #tpu.pipeline_mode<synchronous>, transform_indices = @transform_9, window_bounds = array<i64: 2, 1>}, {transform_indices = @transform_10, window_bounds = array<i64: 4, 32>}, {transform_indices = @transform_11, window_bounds = array<i64: 4, 8>}]} {
    %c0 = arith.constant 0 : index
    %c0_0 = arith.constant 0 : index
    %c0_1 = arith.constant 0 : index
    %0 = vector.load %arg2[%c0, %c0_0, %c0_1] : memref<4x8x32xf32, #tpu.memory_space<vmem>>, vector<4x8x32xf32>
    %1 = vector.shape_cast %0 : vector<4x8x32xf32> to vector<32x32xf32>
    %c0_2 = arith.constant 0 : index
    %c0_3 = arith.constant 0 : index
    %2 = vector.load %arg3[%c0_2, %c0_3] : memref<4x8xi32, #tpu.memory_space<vmem>>, vector<4x8xi32>
    %c0_i32 = arith.constant 0 : i32
    %3 = vector.broadcast %c0_i32 : i32 to vector<4x8xi32>
    %4 = arith.cmpi ne, %2, %3 : vector<4x8xi32>
    %c0_4 = arith.constant 0 : index
    %c0_5 = arith.constant 0 : index
    %5 = vector.load %arg4[%c0_4, %c0_5] : memref<32x32xf32, #tpu.memory_space<vmem>>, vector<32x32xf32>
    %cst = arith.constant dense<0.000000e+00> : vector<32x32xf32>
    %6 = tpu.matmul %1, %5, %cst {dimension_numbers = #tpu.dot_dimension_numbers<[1], [0], [0], [1], [0, 0, 1, 1], [], []>} : vector<32x32xf32>, vector<32x32xf32>, vector<32x32xf32> -> vector<32x32xf32>
    %c0_6 = arith.constant 0 : index
    %c0_7 = arith.constant 0 : index
    %7 = vector.load %arg5[%c0_6, %c0_7] : memref<1x32xf32, #tpu.memory_space<vmem>>, vector<1x32xf32>
    %8 = vector.broadcast %7 : vector<1x32xf32> to vector<32x32xf32>
    %9 = arith.addf %6, %8 : vector<32x32xf32>
    %c0_8 = arith.constant 0 : index
    %c0_9 = arith.constant 0 : index
    %10 = vector.load %arg6[%c0_8, %c0_9] : memref<32x32xf32, #tpu.memory_space<vmem>>, vector<32x32xf32>
    %cst_10 = arith.constant dense<0.000000e+00> : vector<32x32xf32>
    %11 = tpu.matmul %9, %10, %cst_10 {dimension_numbers = #tpu.dot_dimension_numbers<[1], [0], [0], [1], [0, 0, 1, 1], [], []>} : vector<32x32xf32>, vector<32x32xf32>, vector<32x32xf32> -> vector<32x32xf32>
    %c0_11 = arith.constant 0 : index
    %c0_12 = arith.constant 0 : index
    %12 = vector.load %arg1[%c0_11, %c0_12] : memref<4x32xf32, #tpu.memory_space<vmem>>, vector<4x32xf32>
    %c0_13 = arith.constant 0 : index
    %c0_14 = arith.constant 0 : index
    %13 = vector.load %arg7[%c0_13, %c0_14] : memref<32x32xf32, #tpu.memory_space<vmem>>, vector<32x32xf32>
    %cst_15 = arith.constant dense<0.000000e+00> : vector<4x32xf32>
    %14 = tpu.matmul %12, %13, %cst_15 {dimension_numbers = #tpu.dot_dimension_numbers<[1], [0], [0], [1], [0, 0, 1, 1], [], []>} : vector<4x32xf32>, vector<32x32xf32>, vector<4x32xf32> -> vector<4x32xf32>
    %c0_16 = arith.constant 0 : index
    %c0_17 = arith.constant 0 : index
    %15 = vector.load %arg8[%c0_16, %c0_17] : memref<1x32xf32, #tpu.memory_space<vmem>>, vector<1x32xf32>
    %16 = vector.broadcast %15 : vector<1x32xf32> to vector<4x32xf32>
    %17 = arith.addf %14, %16 : vector<4x32xf32>
    %18 = vector.shape_cast %11 : vector<32x32xf32> to vector<4x8x32xf32>
    %19 = vector.shape_cast %17 : vector<4x32xf32> to vector<4x1x32xf32>
    %20 = vector.broadcast %19 : vector<4x1x32xf32> to vector<4x8x32xf32>
    %21 = arith.addf %18, %20 : vector<4x8x32xf32>
    %22 = math.tanh %21 : vector<4x8x32xf32>
    %23 = vector.shape_cast %9 : vector<32x32xf32> to vector<4x8x32xf32>
    %c0_18 = arith.constant 0 : index
    %c0_19 = arith.constant 0 : index
    %24 = vector.load %arg9[%c0_18, %c0_19] : memref<2x16xf32, #tpu.memory_space<vmem>>, vector<1x16xf32>
    %25 = vector.extract_strided_slice %22 {offsets = [0, 0, 0], sizes = [4, 8, 16], strides = [1, 1, 1]} : vector<4x8x32xf32> to vector<4x8x16xf32>
    %26 = vector.shape_cast %24 : vector<1x16xf32> to vector<1x1x16xf32>
    %27 = vector.broadcast %26 : vector<1x1x16xf32> to vector<4x8x16xf32>
    %28 = arith.mulf %25, %27 : vector<4x8x16xf32>
    %cst_20 = arith.constant dense<0.000000e+00> : vector<4x8xf32>
    %29 = vector.multi_reduction <add>, %28, %cst_20 [2] : vector<4x8x16xf32> to vector<4x8xf32>
    %c0_21 = arith.constant 0 : index
    %c0_22 = arith.constant 0 : index
    %30 = vector.load %arg10[%c0_21, %c0_22] : memref<2x1xf32, #tpu.memory_space<vmem>>, vector<1x1xf32>
    %31 = vector.broadcast %30 : vector<1x1xf32> to vector<4x8xf32>
    %32 = arith.addf %29, %31 : vector<4x8xf32>
    %cst_23 = arith.constant 0xFF800000 : f32
    %33 = vector.broadcast %cst_23 : f32 to vector<4x8xf32>
    %34 = arith.select %4, %33, %32 : vector<4x8xi1>, vector<4x8xf32>
    %cst_24 = arith.constant dense<0xFF800000> : vector<4xf32>
    %35 = vector.multi_reduction <maximumf>, %34, %cst_24 [1] : vector<4x8xf32> to vector<4xf32>
    %36 = vector.shape_cast %35 : vector<4xf32> to vector<4x1xf32>
    %37 = vector.broadcast %36 : vector<4x1xf32> to vector<4x8xf32>
    %38 = arith.subf %34, %37 : vector<4x8xf32>
    %39 = math.exp %38 : vector<4x8xf32>
    %cst_25 = arith.constant dense<0.000000e+00> : vector<4xf32>
    %40 = vector.multi_reduction <add>, %39, %cst_25 [1] : vector<4x8xf32> to vector<4xf32>
    %41 = vector.shape_cast %40 : vector<4xf32> to vector<4x1xf32>
    %42 = vector.broadcast %41 : vector<4x1xf32> to vector<4x8xf32>
    %43 = arith.divf %39, %42 : vector<4x8xf32>
    %44 = vector.shape_cast %43 : vector<4x8xf32> to vector<4x8x1xf32>
    %45 = vector.extract_strided_slice %23 {offsets = [0, 0, 0], sizes = [4, 8, 16], strides = [1, 1, 1]} : vector<4x8x32xf32> to vector<4x8x16xf32>
    %46 = vector.broadcast %44 : vector<4x8x1xf32> to vector<4x8x16xf32>
    %47 = arith.mulf %46, %45 : vector<4x8x16xf32>
    %cst_26 = arith.constant dense<0.000000e+00> : vector<4x16xf32>
    %48 = vector.multi_reduction <add>, %47, %cst_26 [1] : vector<4x8x16xf32> to vector<4x16xf32>
    %c1 = arith.constant 1 : index
    %c0_27 = arith.constant 0 : index
    %49 = vector.load %arg9[%c1, %c0_27] : memref<2x16xf32, #tpu.memory_space<vmem>>, vector<1x16xf32>
    %50 = vector.extract_strided_slice %22 {offsets = [0, 0, 16], sizes = [4, 8, 16], strides = [1, 1, 1]} : vector<4x8x32xf32> to vector<4x8x16xf32>
    %51 = vector.shape_cast %49 : vector<1x16xf32> to vector<1x1x16xf32>
    %52 = vector.broadcast %51 : vector<1x1x16xf32> to vector<4x8x16xf32>
    %53 = arith.mulf %50, %52 : vector<4x8x16xf32>
    %cst_28 = arith.constant dense<0.000000e+00> : vector<4x8xf32>
    %54 = vector.multi_reduction <add>, %53, %cst_28 [2] : vector<4x8x16xf32> to vector<4x8xf32>
    %c1_29 = arith.constant 1 : index
    %c0_30 = arith.constant 0 : index
    %55 = vector.load %arg10[%c1_29, %c0_30] : memref<2x1xf32, #tpu.memory_space<vmem>>, vector<1x1xf32>
    %56 = vector.broadcast %55 : vector<1x1xf32> to vector<4x8xf32>
    %57 = arith.addf %54, %56 : vector<4x8xf32>
    %cst_31 = arith.constant 0xFF800000 : f32
    %58 = vector.broadcast %cst_31 : f32 to vector<4x8xf32>
    %59 = arith.select %4, %58, %57 : vector<4x8xi1>, vector<4x8xf32>
    %cst_32 = arith.constant dense<0xFF800000> : vector<4xf32>
    %60 = vector.multi_reduction <maximumf>, %59, %cst_32 [1] : vector<4x8xf32> to vector<4xf32>
    %61 = vector.shape_cast %60 : vector<4xf32> to vector<4x1xf32>
    %62 = vector.broadcast %61 : vector<4x1xf32> to vector<4x8xf32>
    %63 = arith.subf %59, %62 : vector<4x8xf32>
    %64 = math.exp %63 : vector<4x8xf32>
    %cst_33 = arith.constant dense<0.000000e+00> : vector<4xf32>
    %65 = vector.multi_reduction <add>, %64, %cst_33 [1] : vector<4x8xf32> to vector<4xf32>
    %66 = vector.shape_cast %65 : vector<4xf32> to vector<4x1xf32>
    %67 = vector.broadcast %66 : vector<4x1xf32> to vector<4x8xf32>
    %68 = arith.divf %64, %67 : vector<4x8xf32>
    %69 = vector.shape_cast %68 : vector<4x8xf32> to vector<4x8x1xf32>
    %70 = vector.extract_strided_slice %23 {offsets = [0, 0, 16], sizes = [4, 8, 16], strides = [1, 1, 1]} : vector<4x8x32xf32> to vector<4x8x16xf32>
    %71 = vector.broadcast %69 : vector<4x8x1xf32> to vector<4x8x16xf32>
    %72 = arith.mulf %71, %70 : vector<4x8x16xf32>
    %cst_34 = arith.constant dense<0.000000e+00> : vector<4x16xf32>
    %73 = vector.multi_reduction <add>, %72, %cst_34 [1] : vector<4x8x16xf32> to vector<4x16xf32>
    %74 = arith.maximumf %43, %68 : vector<4x8xf32>
    %75 = tpu.concatenate %48, %73 in 1 : vector<4x16xf32>, vector<4x16xf32> -> vector<4x32xf32>
    %c0_35 = arith.constant 0 : index
    %c0_36 = arith.constant 0 : index
    %76 = vector.load %arg11[%c0_35, %c0_36] : memref<4x32xf32, #tpu.memory_space<vmem>>, vector<4x32xf32>
    tpu.vector_store %arg11[%c0_35, %c0_36], %75 {strides = array<i32>} : memref<4x32xf32, #tpu.memory_space<vmem>>, vector<4x32xf32>,
    %c0_37 = arith.constant 0 : index
    %c0_38 = arith.constant 0 : index
    %77 = vector.load %arg12[%c0_37, %c0_38] : memref<4x8xf32, #tpu.memory_space<vmem>>, vector<4x8xf32>
    tpu.vector_store %arg12[%c0_37, %c0_38], %74 {strides = array<i32>} : memref<4x8xf32, #tpu.memory_space<vmem>>, vector<4x8xf32>,
    return
  }
  func.func @transform_0(%arg0: i32) -> (i32, i32) {
    %c0_i32 = arith.constant 0 : i32
    %c0_i32_0 = arith.constant 0 : i32
    return %arg0, %c0_i32 : i32, i32
  }
  func.func @transform_1(%arg0: i32) -> (i32, i32, i32) {
    %c0_i32 = arith.constant 0 : i32
    %c0_i32_0 = arith.constant 0 : i32
    %c0_i32_1 = arith.constant 0 : i32
    return %arg0, %c0_i32, %c0_i32_0 : i32, i32, i32
  }
  func.func @transform_2(%arg0: i32) -> (i32, i32) {
    %c0_i32 = arith.constant 0 : i32
    %c0_i32_0 = arith.constant 0 : i32
    return %arg0, %c0_i32 : i32, i32
  }
  func.func @transform_3(%arg0: i32) -> (i32, i32) {
    %c0_i32 = arith.constant 0 : i32
    %c0_i32_0 = arith.constant 0 : i32
    %c0_i32_1 = arith.constant 0 : i32
    return %c0_i32, %c0_i32_0 : i32, i32
  }
  func.func @transform_4(%arg0: i32) -> (i32, i32) {
    %c0_i32 = arith.constant 0 : i32
    %c0_i32_0 = arith.constant 0 : i32
    %c0_i32_1 = arith.constant 0 : i32
    return %c0_i32, %c0_i32_0 : i32, i32
  }
  func.func @transform_5(%arg0: i32) -> (i32, i32) {
    %c0_i32 = arith.constant 0 : i32
    %c0_i32_0 = arith.constant 0 : i32
    %c0_i32_1 = arith.constant 0 : i32
    return %c0_i32, %c0_i32_0 : i32, i32
  }
  func.func @transform_6(%arg0: i32) -> (i32, i32) {
    %c0_i32 = arith.constant 0 : i32
    %c0_i32_0 = arith.constant 0 : i32
    %c0_i32_1 = arith.constant 0 : i32
    return %c0_i32, %c0_i32_0 : i32, i32
  }
  func.func @transform_7(%arg0: i32) -> (i32, i32) {
    %c0_i32 = arith.constant 0 : i32
    %c0_i32_0 = arith.constant 0 : i32
    %c0_i32_1 = arith.constant 0 : i32
    return %c0_i32, %c0_i32_0 : i32, i32
  }
  func.func @transform_8(%arg0: i32) -> (i32, i32) {
    %c0_i32 = arith.constant 0 : i32
    %c0_i32_0 = arith.constant 0 : i32
    %c0_i32_1 = arith.constant 0 : i32
    return %c0_i32, %c0_i32_0 : i32, i32
  }
  func.func @transform_9(%arg0: i32) -> (i32, i32) {
    %c0_i32 = arith.constant 0 : i32
    %c0_i32_0 = arith.constant 0 : i32
    %c0_i32_1 = arith.constant 0 : i32
    return %c0_i32, %c0_i32_0 : i32, i32
  }
  func.func @transform_10(%arg0: i32) -> (i32, i32) {
    %c0_i32 = arith.constant 0 : i32
    %c0_i32_0 = arith.constant 0 : i32
    return %arg0, %c0_i32 : i32, i32
  }
  func.func @transform_11(%arg0: i32) -> (i32, i32) {
    %c0_i32 = arith.constant 0 : i32
    %c0_i32_0 = arith.constant 0 : i32
    return %arg0, %c0_i32 : i32, i32
  }
}

</mosaic_0001>

<llo_original>
// kernel: mh_attention_forward.1
$region0: #{mh_attention_forward.1}
  #allocation0 [shape = 'u32[]', space=smem, size = 0x4, offset = 0x4, fixed_abs, tag = 'smem constant byte address 0x4 - core index']
  #allocation1 [shape = 'u32[144,128]{1,0:T(1,128)}', space=vmem, size = 0x12000, scoped, tag = 'internal scratch']
  %s0 = inlined_call_operand.vmem [shape: f32[4,32], index: 0, kind: input, shape index: {}]
  %s1 = inlined_call_operand.vmem [shape: f32[4,8,32], index: 1, kind: input, shape index: {}]
  %s2 = inlined_call_operand.vmem [shape: s32[4,8], index: 2, kind: input, shape index: {}]
  %s3 = inlined_call_operand.vmem [shape: f32[32,32], index: 3, kind: input, shape index: {}]
  %s4 = inlined_call_operand.vmem [shape: f32[1,32], index: 4, kind: input, shape index: {}]
  %s5 = inlined_call_operand.vmem [shape: f32[32,32], index: 5, kind: input, shape index: {}]
  %s6 = inlined_call_operand.vmem [shape: f32[32,32], index: 6, kind: input, shape index: {}]
  %s7 = inlined_call_operand.vmem [shape: f32[1,32], index: 7, kind: input, shape index: {}]
  %s8 = inlined_call_operand.vmem [shape: f32[2,16], index: 8, kind: input, shape index: {}]
  %s9 = inlined_call_operand.vmem [shape: f32[2,1], index: 9, kind: input, shape index: {}]
  %s10 = inlined_call_operand.hbm [shape: f32[4,32], index: 10, kind: output, shape index: {0}]
  %s11 = inlined_call_operand.hbm [shape: f32[4,8], index: 11, kind: output, shape index: {1}]
  %12 = xla_tuple %s10, %s11
  %s13 = sld [smem:[#allocation0]]
  $region58: #{mh_attention_forward.1} parent=0
    _
  %s15 = ssub.s32 1, %s13
  %s16 = scalar_select 0, %s15, %s13
  $region1: #{mh_attention_forward.1} parent=0
    #allocation2 [shape = 'u8[2048]{0}', space=vmem, size = 0x800, scoped, tag = 'output window, operand 0, single buffered']
    #allocation3 [shape = 's32[1]{0}', space=sflag, size = 0x4, scoped, tag = 'scoped memory for mh_attention_forward.1']
    #allocation4 [shape = 'u8[2048]{0}', space=vmem, size = 0x800, scoped, tag = 'output window, operand 1, single buffered']
    #allocation5 [shape = 's32[1]{0}', space=sflag, size = 0x4, scoped, tag = 'scoped memory for mh_attention_forward.1']
    %17 = vsyncpa [#allocation3], 0
    %18 = vsyncpa [#allocation5], 0
    // Predicated region
    $region2: #{mh_attention_forward.1} parent=1 // pred_check
      _
    $region3: #{mh_attention_forward.1} parent=1 // pred_check_branch
      %20 = sbr.rel (0) target = $region5
    $region4: #{mh_attention_forward.1} parent=1 // pred_region
      _
    $region5: #{mh_attention_forward.1} parent=1 // pred_fallthru
      _
    // Predicated region
    $region6: #{mh_attention_forward.1} parent=1 // pred_check
      _
    $region7: #{mh_attention_forward.1} parent=1 // pred_check_branch
      %22 = sbr.rel (0) target = $region9
    $region8: #{mh_attention_forward.1} parent=1 // pred_region
      _
    $region9: #{mh_attention_forward.1} parent=1 // pred_fallthru
      _
    // Predicated region
    $region10: #{mh_attention_forward.1} parent=1 // pred_check
      _
    $region11: #{mh_attention_forward.1} parent=1 // pred_check_branch
      %24 = sbr.rel (0) target = $region13
    $region12: #{mh_attention_forward.1} parent=1 // pred_region
      _
    $region13: #{mh_attention_forward.1} parent=1 // pred_fallthru
      _
    // Predicated region
    $region14: #{mh_attention_forward.1} parent=1 // pred_check
      _
    $region15: #{mh_attention_forward.1} parent=1 // pred_check_branch
      %26 = sbr.rel (0) target = $region17
    $region16: #{mh_attention_forward.1} parent=1 // pred_region
      _
    $region17: #{mh_attention_forward.1} parent=1 // pred_fallthru
      _
    // Predicated region
    $region18: #{mh_attention_forward.1} parent=1 // pred_check
      _
    $region19: #{mh_attention_forward.1} parent=1 // pred_check_branch
      %28 = sbr.rel (0) target = $region21
    $region20: #{mh_attention_forward.1} parent=1 // pred_region
      _
    $region21: #{mh_attention_forward.1} parent=1 // pred_fallthru
      _
    // Predicated region
    $region22: #{mh_attention_forward.1} parent=1 // pred_check
      _
    $region23: #{mh_attention_forward.1} parent=1 // pred_check_branch
      %30 = sbr.rel (0) target = $region25
    $region24: #{mh_attention_forward.1} parent=1 // pred_region
      _
    $region25: #{mh_attention_forward.1} parent=1 // pred_fallthru
      _
    // Predicated region
    $region26: #{mh_attention_forward.1} parent=1 // pred_check
      _
    $region27: #{mh_attention_forward.1} parent=1 // pred_check_branch
      %32 = sbr.rel (0) target = $region29
    $region28: #{mh_attention_forward.1} parent=1 // pred_region
      _
    $region29: #{mh_attention_forward.1} parent=1 // pred_fallthru
      _
    // Predicated region
    $region30: #{mh_attention_forward.1} parent=1 // pred_check
      _
    $region31: #{mh_attention_forward.1} parent=1 // pred_check_branch
      %34 = sbr.rel (0) target = $region33
    $region32: #{mh_attention_forward.1} parent=1 // pred_region
      _
    $region33: #{mh_attention_forward.1} parent=1 // pred_fallthru
      _
    // Predicated region
    $region34: #{mh_attention_forward.1} parent=1 // pred_check
      _
    $region35: #{mh_attention_forward.1} parent=1 // pred_check_branch
      %36 = sbr.rel (0) target = $region37
    $region36: #{mh_attention_forward.1} parent=1 // pred_region
      _
    $region37: #{mh_attention_forward.1} parent=1 // pred_fallthru
      _
    // Predicated region
    $region38: #{mh_attention_forward.1} parent=1 // pred_check
      _
    $region39: #{mh_attention_forward.1} parent=1 // pred_check_branch
      %38 = sbr.rel (0) target = $region41
    $region40: #{mh_attention_forward.1} parent=1 // pred_region
      _
    $region41: #{mh_attention_forward.1} parent=1 // pred_fallthru
      _
    %v39 = vld [vmem:[%s1] sm:$0xff]
    %v40 = vld [vmem:[%s1 + $0x8] sm:$0xff]
    %v41 = vld [vmem:[%s1 + $0x10] sm:$0xff]
    %v42 = vld [vmem:[%s1 + $0x18] sm:$0xff]
    %v43 = vld [vmem:[%s2] sm:$0xf]
    %vm44 = vcmp.ne.s32.totalorder %v43, 0
    %v45 = vld [vmem:[%s3] sm:$0xff]
    %v46 = vld [vmem:[%s3 + $0x8] sm:$0xff]
    %v47 = vld [vmem:[%s3 + $0x10] sm:$0xff]
    %v48 = vld [vmem:[%s3 + $0x18] sm:$0xff]
    %v49 = vld [vmem:[%s4] sm:$0x1]
    %v51 = vlaneseq
    %v52 = vshrl.u32 %v51, 7
    %v53 = vsub.s32 0, %v52
    %v54 = vrot.slane %v49, %v53
    %vm56 = vcmask 261120
    %v58 = vsel %vm56, %v39, 0
    %v61 = vsel %vm56, %v40, 0
    %v64 = vsel %vm56, %v41, 0
    %v67 = vsel %vm56, %v42, 0
    %69 = vmatprep.subr.mxu0 0.0
    %70 = vmatpush1.msra.mxu0 0.0
    %71 = vmatprep.subr.mxu0 0.0
    %72 = vmatpush1.msra.mxu0 0.0
    %73 = vmatprep.subr.mxu0 0.0
    %74 = vmatpush1.msra.mxu0 0.0
    %75 = vmatprep.subr.mxu0 0.0
    %76 = vmatpush1.msra.mxu0 0.0
    %77 = vmatprep.subr.mxu0 0.0
    %78 = vmatpush1.msra.mxu0 0.0
    %79 = vmatprep.subr.mxu0 0.0
    %80 = vmatpush1.msra.mxu0 0.0
    %81 = vmatprep.subr.mxu0 0.0
    %82 = vmatpush1.msra.mxu0 0.0
    %83 = vmatprep.subr.mxu0 0.0
    %84 = vmatpush1.msra.mxu0 0.0
    %85 = vmatprep.subr.mxu0 0.0
    %86 = vmatpush1.msra.mxu0 0.0
    %87 = vmatprep.subr.mxu0 0.0
    %88 = vmatpush1.msra.mxu0 0.0
    %89 = vmatprep.subr.mxu0 0.0
    %90 = vmatpush1.msra.mxu0 0.0
    %91 = vmatprep.subr.mxu0 0.0
    %92 = vmatpush1.msra.mxu0 0.0
    %93 = vmatprep.subr.mxu0 0.0
    %94 = vmatpush1.msra.mxu0 %v48
    %95 = vmatprep.subr.mxu0 0.0
    %96 = vmatpush1.msra.mxu0 %v47
    %97 = vmatprep.subr.mxu0 0.0
    %98 = vmatpush1.msra.mxu0 %v46
    %99 = vmatprep.subr.mxu0 0.0
    %100 = vmatpush1.msra.mxu0 %v45
    %101 = vmatprep.subr.mxu0 0.0
    %102 = vmatpush2.msra.mxu0 0.0
    %103 = vmatprep.subr.mxu0 0.0
    %104 = vmatpush2.msra.mxu0 0.0
    %105 = vmatprep.subr.mxu0 0.0
    %106 = vmatpush2.msra.mxu0 0.0
    %107 = vmatprep.subr.mxu0 0.0
    %108 = vmatpush2.msra.mxu0 0.0
    %109 = vmatprep.subr.mxu0 0.0
    %110 = vmatpush2.msra.mxu0 0.0
    %111 = vmatprep.subr.mxu0 0.0
    %112 = vmatpush2.msra.mxu0 0.0
    %113 = vmatprep.subr.mxu0 0.0
    %114 = vmatpush2.msra.mxu0 0.0
    %115 = vmatprep.subr.mxu0 0.0
    %116 = vmatpush2.msra.mxu0 0.0
    %117 = vmatprep.subr.mxu0 0.0
    %118 = vmatpush2.msra.mxu0 0.0
    %119 = vmatprep.subr.mxu0 0.0
    %120 = vmatpush2.msra.mxu0 0.0
    %121 = vmatprep.subr.mxu0 0.0
    %122 = vmatpush2.msra.mxu0 0.0
    %123 = vmatprep.subr.mxu0 0.0
    %124 = vmatpush2.msra.mxu0 0.0
    %125 = vmatprep.subr.mxu0 0.0
    %126 = vmatpush2.msra.mxu0 0.0
    %127 = vmatprep.subr.mxu0 0.0
    %128 = vmatpush2.msra.mxu0 0.0
    %129 = vmatprep.subr.mxu0 0.0
    %130 = vmatpush2.msra.mxu0 0.0
    %131 = vmatprep.subr.mxu0 0.0
    %132 = vmatpush2.msra.mxu0 0.0
    %133 = vmatprep.mubr.f32.mxu0 0.0
    %134 = vmatmul.mubr.f32.gmra.mxu0 %v58
    %v135 = vpop.f32.mrf.mxu0
    %v136 = vadd.f32 %v54, %v135
    %v137 = vpop.f32.mrf.mxu0
    %138 = vmatprep.mubr.f32.mxu0 0.0
    %139 = vmatmul.mubr.f32.gmra.mxu0 %v61
    %v140 = vpop.f32.mrf.mxu0
    %v141 = vadd.f32 %v54, %v140
    %v142 = vpop.f32.mrf.mxu0
    %143 = vmatprep.mubr.f32.mxu0 0.0
    %144 = vmatmul.mubr.f32.gmra.mxu0 %v64
    %v145 = vpop.f32.mrf.mxu0
    %v146 = vadd.f32 %v54, %v145
    %v147 = vpop.f32.mrf.mxu0
    %148 = vmatprep.mubr.f32.mxu0 0.0
    %149 = vmatmul.mubr.f32.gmra.mxu0 %v67
    %v150 = vpop.f32.mrf.mxu0
    %v151 = vadd.f32 %v54, %v150
    %v152 = vpop.f32.mrf.mxu0
    %153 = vdwg.mxu0
    %v154 = vld [vmem:[%s5] sm:$0xff]
    %v155 = vld [vmem:[%s5 + $0x8] sm:$0xff]
    %v156 = vld [vmem:[%s5 + $0x10] sm:$0xff]
    %v157 = vld [vmem:[%s5 + $0x18] sm:$0xff]
    %v159 = vsel %vm56, %v136, 0
    %v162 = vsel %vm56, %v141, 0
    %v165 = vsel %vm56, %v146, 0
    %v168 = vsel %vm56, %v151, 0
    %170 = vmatprep.subr.mxu0 0.0
    %171 = vmatpush1.msra.mxu0 0.0
    %172 = vmatprep.subr.mxu0 0.0
    %173 = vmatpush1.msra.mxu0 0.0
    %174 = vmatprep.subr.mxu0 0.0
    %175 = vmatpush1.msra.mxu0 0.0
    %176 = vmatprep.subr.mxu0 0.0
    %177 = vmatpush1.msra.mxu0 0.0
    %178 = vmatprep.subr.mxu0 0.0
    %179 = vmatpush1.msra.mxu0 0.0
    %180 = vmatprep.subr.mxu0 0.0
    %181 = vmatpush1.msra.mxu0 0.0
    %182 = vmatprep.subr.mxu0 0.0
    %183 = vmatpush1.msra.mxu0 0.0
    %184 = vmatprep.subr.mxu0 0.0
    %185 = vmatpush1.msra.mxu0 0.0
    %186 = vmatprep.subr.mxu0 0.0
    %187 = vmatpush1.msra.mxu0 0.0
    %188 = vmatprep.subr.mxu0 0.0
    %189 = vmatpush1.msra.mxu0 0.0
    %190 = vmatprep.subr.mxu0 0.0
    %191 = vmatpush1.msra.mxu0 0.0
    %192 = vmatprep.subr.mxu0 0.0
    %193 = vmatpush1.msra.mxu0 0.0
    %194 = vmatprep.subr.mxu0 0.0
    %195 = vmatpush1.msra.mxu0 %v157
    %196 = vmatprep.subr.mxu0 0.0
    %197 = vmatpush1.msra.mxu0 %v156
    %198 = vmatprep.subr.mxu0 0.0
    %199 = vmatpush1.msra.mxu0 %v155
    %200 = vmatprep.subr.mxu0 0.0
    %201 = vmatpush1.msra.mxu0 %v154
    %202 = vmatprep.subr.mxu0 0.0
    %203 = vmatpush2.msra.mxu0 0.0
    %204 = vmatprep.subr.mxu0 0.0
    %205 = vmatpush2.msra.mxu0 0.0
    %206 = vmatprep.subr.mxu0 0.0
    %207 = vmatpush2.msra.mxu0 0.0
    %208 = vmatprep.subr.mxu0 0.0
    %209 = vmatpush2.msra.mxu0 0.0
    %210 = vmatprep.subr.mxu0 0.0
    %211 = vmatpush2.msra.mxu0 0.0
    %212 = vmatprep.subr.mxu0 0.0
    %213 = vmatpush2.msra.mxu0 0.0
    %214 = vmatprep.subr.mxu0 0.0
    %215 = vmatpush2.msra.mxu0 0.0
    %216 = vmatprep.subr.mxu0 0.0
    %217 = vmatpush2.msra.mxu0 0.0
    %218 = vmatprep.subr.mxu0 0.0
    %219 = vmatpush2.msra.mxu0 0.0
    %220 = vmatprep.subr.mxu0 0.0
    %221 = vmatpush2.msra.mxu0 0.0
    %222 = vmatprep.subr.mxu0 0.0
    %223 = vmatpush2.msra.mxu0 0.0
    %224 = vmatprep.subr.mxu0 0.0
    %225 = vmatpush2.msra.mxu0 0.0
    %226 = vmatprep.subr.mxu0 0.0
    %227 = vmatpush2.msra.mxu0 0.0
    %228 = vmatprep.subr.mxu0 0.0
    %229 = vmatpush2.msra.mxu0 0.0
    %230 = vmatprep.subr.mxu0 0.0
    %231 = vmatpush2.msra.mxu0 0.0
    %232 = vmatprep.subr.mxu0 0.0
    %233 = vmatpush2.msra.mxu0 0.0
    %234 = vmatprep.mubr.f32.mxu0 0.0
    %235 = vmatmul.mubr.f32.gmra.mxu0 %v159
    %v236 = vpop.f32.mrf.mxu0
    %v237 = vadd.f32 0.0, %v236
    %v238 = vpop.f32.mrf.mxu0
    %239 = vmatprep.mubr.f32.mxu0 0.0
    %240 = vmatmul.mubr.f32.gmra.mxu0 %v162
    %v241 = vpop.f32.mrf.mxu0
    %v242 = vadd.f32 0.0, %v241
    %v243 = vpop.f32.mrf.mxu0
    %244 = vmatprep.mubr.f32.mxu0 0.0
    %245 = vmatmul.mubr.f32.gmra.mxu0 %v165
    %v246 = vpop.f32.mrf.mxu0
    %v247 = vadd.f32 0.0, %v246
    %v248 = vpop.f32.mrf.mxu0
    %249 = vmatprep.mubr.f32.mxu0 0.0
    %250 = vmatmul.mubr.f32.gmra.mxu0 %v168
    %v251 = vpop.f32.mrf.mxu0
    %v252 = vadd.f32 0.0, %v251
    %v253 = vpop.f32.mrf.mxu0
    %254 = vdwg.mxu0
    %v255 = vld [vmem:[%s0] sm:$0xf]
    %v256 = vld [vmem:[%s6] sm:$0xff]
    %v257 = vld [vmem:[%s6 + $0x8] sm:$0xff]
    %v258 = vld [vmem:[%s6 + $0x10] sm:$0xff]
    %v259 = vld [vmem:[%s6 + $0x18] sm:$0xff]
    %v260 = vld [vmem:[%s7] sm:$0x1]
    %v262 = vlaneseq
    %v263 = vshrl.u32 %v262, 7
    %v264 = vsub.s32 0, %v263
    %v265 = vrot.slane %v260, %v264
    %v268 = vsel %vm56, %v255, 0
    %270 = vmatprep.subr.mxu0 0.0
    %271 = vmatpush1.msra.mxu0 0.0
    %272 = vmatprep.subr.mxu0 0.0
    %273 = vmatpush1.msra.mxu0 0.0
    %274 = vmatprep.subr.mxu0 0.0
    %275 = vmatpush1.msra.mxu0 0.0
    %276 = vmatprep.subr.mxu0 0.0
    %277 = vmatpush1.msra.mxu0 0.0
    %278 = vmatprep.subr.mxu0 0.0
    %279 = vmatpush1.msra.mxu0 0.0
    %280 = vmatprep.subr.mxu0 0.0
    %281 = vmatpush1.msra.mxu0 0.0
    %282 = vmatprep.subr.mxu0 0.0
    %283 = vmatpush1.msra.mxu0 0.0
    %284 = vmatprep.subr.mxu0 0.0
    %285 = vmatpush1.msra.mxu0 0.0
    %286 = vmatprep.subr.mxu0 0.0
    %287 = vmatpush1.msra.mxu0 0.0
    %288 = vmatprep.subr.mxu0 0.0
    %289 = vmatpush1.msra.mxu0 0.0
    %290 = vmatprep.subr.mxu0 0.0
    %291 = vmatpush1.msra.mxu0 0.0
    %292 = vmatprep.subr.mxu0 0.0
    %293 = vmatpush1.msra.mxu0 0.0
    %294 = vmatprep.subr.mxu0 0.0
    %295 = vmatpush1.msra.mxu0 %v259
    %296 = vmatprep.subr.mxu0 0.0
    %297 = vmatpush1.msra.mxu0 %v258
    %298 = vmatprep.subr.mxu0 0.0
    %299 = vmatpush1.msra.mxu0 %v257
    %300 = vmatprep.subr.mxu0 0.0
    %301 = vmatpush1.msra.mxu0 %v256
    %302 = vmatprep.subr.mxu0 0.0
    %303 = vmatpush2.msra.mxu0 0.0
    %304 = vmatprep.subr.mxu0 0.0
    %305 = vmatpush2.msra.mxu0 0.0
    %306 = vmatprep.subr.mxu0 0.0
    %307 = vmatpush2.msra.mxu0 0.0
    %308 = vmatprep.subr.mxu0 0.0
    %309 = vmatpush2.msra.mxu0 0.0
    %310 = vmatprep.subr.mxu0 0.0
    %311 = vmatpush2.msra.mxu0 0.0
    %312 = vmatprep.subr.mxu0 0.0
    %313 = vmatpush2.msra.mxu0 0.0
    %314 = vmatprep.subr.mxu0 0.0
    %315 = vmatpush2.msra.mxu0 0.0
    %316 = vmatprep.subr.mxu0 0.0
    %317 = vmatpush2.msra.mxu0 0.0
    %318 = vmatprep.subr.mxu0 0.0
    %319 = vmatpush2.msra.mxu0 0.0
    %320 = vmatprep.subr.mxu0 0.0
    %321 = vmatpush2.msra.mxu0 0.0
    %322 = vmatprep.subr.mxu0 0.0
    %323 = vmatpush2.msra.mxu0 0.0
    %324 = vmatprep.subr.mxu0 0.0
    %325 = vmatpush2.msra.mxu0 0.0
    %326 = vmatprep.subr.mxu0 0.0
    %327 = vmatpush2.msra.mxu0 0.0
    %328 = vmatprep.subr.mxu0 0.0
    %329 = vmatpush2.msra.mxu0 0.0
    %330 = vmatprep.subr.mxu0 0.0
    %331 = vmatpush2.msra.mxu0 0.0
    %332 = vmatprep.subr.mxu0 0.0
    %333 = vmatpush2.msra.mxu0 0.0
    %334 = vmatprep.mubr.f32.mxu0 0.0
    %335 = vmatmul.mubr.f32.gmra.mxu0 %v268
    %v336 = vpop.f32.mrf.mxu0
    %v337 = vadd.f32 %v265, %v336
    %v338 = vpop.f32.mrf.mxu0
    %339 = vdwg.mxu0
    %v342 = vunpack.c.l.s4 1966171168
    %v343 = vunpack.c.0.s8 %v342
    %v344 = vlaneseq
    %v345 = vshrl.u32 %v344, 7
    %v346 = vsub.s32 %v343, %v345
    %v347 = vrot.slane %v337, %v346
    %v348 = vcombine.high %v347, %v347
    %v350 = vunpack.c.l.s4 1966171168
    %v351 = vunpack.c.0.s8 %v350
    %v352 = vlaneseq
    %v353 = vshrl.u32 %v352, 7
    %v354 = vsub.s32 %v351, %v353
    %v355 = vrot.slane %v347, %v354
    %v357 = vunpack.c.l.s4 1966171168
    %v358 = vunpack.c.0.s8 %v357
    %v359 = vlaneseq
    %v360 = vshrl.u32 %v359, 7
    %v361 = vsub.s32 %v358, %v360
    %v362 = vrot.slane %v348, %v361
    %v363 = vcombine.high %v355, %v355
    %v364 = vcombine.high %v362, %v362
    %v365 = vlaneseq
    %v366 = vshrl.u32 %v365, 7
    %v367 = vsub.s32 0, %v366
    %v368 = vrot.slane %v355, %v367
    %v369 = vlaneseq
    %v370 = vshrl.u32 %v369, 7
    %v371 = vsub.s32 0, %v370
    %v372 = vrot.slane %v362, %v371
    %v373 = vlaneseq
    %v374 = vshrl.u32 %v373, 7
    %v375 = vsub.s32 0, %v374
    %v376 = vrot.slane %v363, %v375
    %v377 = vlaneseq
    %v378 = vshrl.u32 %v377, 7
    %v379 = vsub.s32 0, %v378
    %v380 = vrot.slane %v364, %v379
    %v385 = vadd.f32 %v237, %v368
    %v386 = vadd.f32 %v242, %v372
    %v387 = vadd.f32 %v247, %v376
    %v388 = vadd.f32 %v252, %v380
    %v389 = vtanh.pop %v385
    %v390 = vtanh.pop %v386
    %v391 = vtanh.pop %v387
    %v392 = vtanh.pop %v388
    %v393 = vld [vmem:[%s8] sm:$0x1]
    %v394 = vlaneseq
    %v395 = vshrl.u32 %v394, 7
    %v396 = vsub.s32 0, %v395
    %v397 = vrot.slane %v393, %v396
    %v398 = vmul.f32 %v389, %v397
    %v399 = vmul.f32 %v390, %v397
    %v400 = vmul.f32 %v391, %v397
    %v401 = vmul.f32 %v392, %v397
    %vm402 = vcmask 130048
    %v403 = vsel %vm402, %v398, 0.0
    %404 = vadd.xlane.f32.xlu0 %v403
    %v405 = vpop.xlane.xlu0 %404
    %v406 = vsel %vm402, %v399, 0.0
    %407 = vadd.xlane.f32.xlu0 %v406
    %v408 = vpop.xlane.xlu0 %407
    %v409 = vsel %vm402, %v400, 0.0
    %410 = vadd.xlane.f32.xlu0 %v409
    %v411 = vpop.xlane.xlu0 %410
    %v412 = vsel %vm402, %v401, 0.0
    %413 = vadd.xlane.f32.xlu0 %v412
    %v414 = vpop.xlane.xlu0 %413
    %v415 = vld [vmem:[%s9] sm:$0x1]
    %s417 = vtos %v415
    %v418 = vstv %s417
    %v420 = vadd.f32 %v405, %v418
    %v421 = vadd.f32 %v408, %v418
    %v422 = vadd.f32 %v411, %v418
    %v423 = vadd.f32 %v414, %v418
    %v428 = vlaneseq
    %v429 = vand.u32 %v428, 127
    %v430 = vlaneseq
    %v431 = vshrl.u32 %v430, 7
    %v432 = vsub.s32 %v429, %v431
    %v433 = vrot.slane %v420, %v432
    %v434 = vlaneseq
    %v435 = vshrl.u32 %v434, 7
    %v436 = vsub.s32 %v429, %v435
    %v437 = vrot.slane %v421, %v436
    %v438 = vlaneseq
    %v439 = vshrl.u32 %v438, 7
    %v440 = vsub.s32 %v429, %v439
    %v441 = vrot.slane %v422, %v440
    %v442 = vlaneseq
    %v443 = vshrl.u32 %v442, 7
    %v444 = vsub.s32 %v429, %v443
    %v445 = vrot.slane %v423, %v444
    %vm446 = vcmask 1041409
    %v447 = vsel %vm446, %v437, %v433
    %vm448 = vcmask 1042434
    %v449 = vsel %vm448, %v441, %v447
    %vm450 = vcmask 1043459
    %v451 = vsel %vm450, %v445, %v449
    %v453 = vsel %vm44, -inf, %v451
    %vm454 = vcmask 60416
    %v455 = vsel %vm454, %v453, -inf
    %456 = vmax.xlane.f32.xlu0 %v455
    %v457 = vpop.xlane.xlu0 %456
    %v458 = vsub.f32 %v453, %v457
    %v459 = vmul.f32 %v458, 1.442695
    %v460 = vpow.pop %v459
    %v461 = vsel %vm454, %v460, 0.0
    %462 = vadd.xlane.f32.xlu0 %v461
    %v463 = vpop.xlane.xlu0 %462
    %v464 = vrcp.pop %v463
    %v465 = vmul.f32 %v460, %v464
    %v466 = vlaneseq
    %v467 = vshrl.u32 %v466, 7
    %v468 = vsub.s32 0, %v467
    %v469 = vrot.slane %v465, %v468
    %471 = vbcast.lane.b32.xlu0 %v469, 256
    %v472 = vpop.permute.xlu0 %471
    %v473 = vlaneseq
    %v474 = vshrl.u32 %v473, 7
    %v475 = vsub.s32 1, %v474
    %v476 = vrot.slane %v465, %v475
    %478 = vbcast.lane.b32.xlu0 %v476, 256
    %v479 = vpop.permute.xlu0 %478
    %v480 = vlaneseq
    %v481 = vshrl.u32 %v480, 7
    %v482 = vsub.s32 2, %v481
    %v483 = vrot.slane %v465, %v482
    %485 = vbcast.lane.b32.xlu0 %v483, 256
    %v486 = vpop.permute.xlu0 %485
    %v487 = vlaneseq
    %v488 = vshrl.u32 %v487, 7
    %v489 = vsub.s32 3, %v488
    %v490 = vrot.slane %v465, %v489
    %492 = vbcast.lane.b32.xlu0 %v490, 256
    %v493 = vpop.permute.xlu0 %492
    %v494 = vmul.f32 %v472, %v136
    %v495 = vmul.f32 %v479, %v141
    %v496 = vmul.f32 %v486, %v146
    %v497 = vmul.f32 %v493, %v151
    %v498 = vsel %vm402, %v494, 0.0
    %v499 = vrot.slane %v498, 4
    %v500 = vadd.f32 %v498, %v499
    %v501 = vrot.slane %v500, 2
    %v502 = vadd.f32 %v500, %v501
    %v503 = vrot.slane %v502, 1
    %v504 = vadd.f32 %v502, %v503
    %v505 = vsel %vm402, %v495, 0.0
    %v506 = vrot.slane %v505, 4
    %v507 = vadd.f32 %v505, %v506
    %v508 = vrot.slane %v507, 2
    %v509 = vadd.f32 %v507, %v508
    %v510 = vrot.slane %v509, 1
    %v511 = vadd.f32 %v509, %v510
    %v512 = vsel %vm402, %v496, 0.0
    %v513 = vrot.slane %v512, 4
    %v514 = vadd.f32 %v512, %v513
    %v515 = vrot.slane %v514, 2
    %v516 = vadd.f32 %v514, %v515
    %v517 = vrot.slane %v516, 1
    %v518 = vadd.f32 %v516, %v517
    %v519 = vsel %vm402, %v497, 0.0
    %v520 = vrot.slane %v519, 4
    %v521 = vadd.f32 %v519, %v520
    %v522 = vrot.slane %v521, 2
    %v523 = vadd.f32 %v521, %v522
    %v524 = vrot.slane %v523, 1
    %v525 = vadd.f32 %v523, %v524
    %v526 = vld [vmem:[%s8 + $0x1] sm:$0x1]
    %v527 = vlaneseq
    %v528 = vshrl.u32 %v527, 7
    %v529 = vsub.s32 0, %v528
    %v530 = vrot.slane %v526, %v529
    %532 = vrot.lane.b32.xlu0 %v530, 16
    %v533 = vpop.permute.xlu0 %532
    %v535 = vmul.f32 %v389, %v533
    %v536 = vmul.f32 %v390, %v533
    %v537 = vmul.f32 %v391, %v533
    %v538 = vmul.f32 %v392, %v533
    %543 = vrot.lane.b32.xlu0 %v535, 112
    %v544 = vpop.permute.xlu0 %543
    %545 = vrot.lane.b32.xlu0 %v536, 112
    %v546 = vpop.permute.xlu0 %545
    %547 = vrot.lane.b32.xlu0 %v537, 112
    %v548 = vpop.permute.xlu0 %547
    %549 = vrot.lane.b32.xlu0 %v538, 112
    %v550 = vpop.permute.xlu0 %549
    %v555 = vsel %vm402, %v544, 0.0
    %556 = vadd.xlane.f32.xlu0 %v555
    %v557 = vpop.xlane.xlu0 %556
    %v558 = vsel %vm402, %v546, 0.0
    %559 = vadd.xlane.f32.xlu0 %v558
    %v560 = vpop.xlane.xlu0 %559
    %v561 = vsel %vm402, %v548, 0.0
    %562 = vadd.xlane.f32.xlu0 %v561
    %v563 = vpop.xlane.xlu0 %562
    %v564 = vsel %vm402, %v550, 0.0
    %565 = vadd.xlane.f32.xlu0 %v564
    %v566 = vpop.xlane.xlu0 %565
    %v567 = vld [vmem:[%s9 + $0x1] sm:$0x1]
    %s569 = vtos %v567
    %v570 = vstv %s569
    %v572 = vadd.f32 %v557, %v570
    %v573 = vadd.f32 %v560, %v570
    %v574 = vadd.f32 %v563, %v570
    %v575 = vadd.f32 %v566, %v570
    %v580 = vlaneseq
    %v581 = vshrl.u32 %v580, 7
    %v582 = vsub.s32 %v429, %v581
    %v583 = vrot.slane %v572, %v582
    %v584 = vlaneseq
    %v585 = vshrl.u32 %v584, 7
    %v586 = vsub.s32 %v429, %v585
    %v587 = vrot.slane %v573, %v586
    %v588 = vlaneseq
    %v589 = vshrl.u32 %v588, 7
    %v590 = vsub.s32 %v429, %v589
    %v591 = vrot.slane %v574, %v590
    %v592 = vlaneseq
    %v593 = vshrl.u32 %v592, 7
    %v594 = vsub.s32 %v429, %v593
    %v595 = vrot.slane %v575, %v594
    %v596 = vsel %vm446, %v587, %v583
    %v597 = vsel %vm448, %v591, %v596
    %v598 = vsel %vm450, %v595, %v597
    %v600 = vsel %vm44, -inf, %v598
    %v601 = vsel %vm454, %v600, -inf
    %602 = vmax.xlane.f32.xlu0 %v601
    %v603 = vpop.xlane.xlu0 %602
    %v604 = vsub.f32 %v600, %v603
    %v605 = vmul.f32 %v604, 1.442695
    %v606 = vpow.pop %v605
    %v607 = vsel %vm454, %v606, 0.0
    %608 = vadd.xlane.f32.xlu0 %v607
    %v609 = vpop.xlane.xlu0 %608
    %v610 = vrcp.pop %v609
    %v611 = vmul.f32 %v606, %v610
    %v612 = vlaneseq
    %v613 = vshrl.u32 %v612, 7
    %v614 = vsub.s32 0, %v613
    %v615 = vrot.slane %v611, %v614
    %617 = vbcast.lane.b32.xlu0 %v615, 256
    %v618 = vpop.permute.xlu0 %617
    %v619 = vlaneseq
    %v620 = vshrl.u32 %v619, 7
    %v621 = vsub.s32 1, %v620
    %v622 = vrot.slane %v611, %v621
    %624 = vbcast.lane.b32.xlu0 %v622, 256
    %v625 = vpop.permute.xlu0 %624
    %v626 = vlaneseq
    %v627 = vshrl.u32 %v626, 7
    %v628 = vsub.s32 2, %v627
    %v629 = vrot.slane %v611, %v628
    %631 = vbcast.lane.b32.xlu0 %v629, 256
    %v632 = vpop.permute.xlu0 %631
    %v633 = vlaneseq
    %v634 = vshrl.u32 %v633, 7
    %v635 = vsub.s32 3, %v634
    %v636 = vrot.slane %v611, %v635
    %638 = vbcast.lane.b32.xlu0 %v636, 256
    %v639 = vpop.permute.xlu0 %638
    %v640 = vmul.f32 %v618, %v136
    %v641 = vmul.f32 %v625, %v141
    %v642 = vmul.f32 %v632, %v146
    %v643 = vmul.f32 %v639, %v151
    %vm644 = vcmask 261248
    %v645 = vsel %vm644, %v640, 0.0
    %v646 = vrot.slane %v645, 4
    %v647 = vadd.f32 %v645, %v646
    %v648 = vrot.slane %v647, 2
    %v649 = vadd.f32 %v647, %v648
    %v650 = vrot.slane %v649, 1
    %v651 = vadd.f32 %v649, %v650
    %v652 = vsel %vm644, %v641, 0.0
    %v653 = vrot.slane %v652, 4
    %v654 = vadd.f32 %v652, %v653
    %v655 = vrot.slane %v654, 2
    %v656 = vadd.f32 %v654, %v655
    %v657 = vrot.slane %v656, 1
    %v658 = vadd.f32 %v656, %v657
    %v659 = vsel %vm644, %v642, 0.0
    %v660 = vrot.slane %v659, 4
    %v661 = vadd.f32 %v659, %v660
    %v662 = vrot.slane %v661, 2
    %v663 = vadd.f32 %v661, %v662
    %v664 = vrot.slane %v663, 1
    %v665 = vadd.f32 %v663, %v664
    %v666 = vsel %vm644, %v643, 0.0
    %v667 = vrot.slane %v666, 4
    %v668 = vadd.f32 %v666, %v667
    %v669 = vrot.slane %v668, 2
    %v670 = vadd.f32 %v668, %v669
    %v671 = vrot.slane %v670, 1
    %v672 = vadd.f32 %v670, %v671
    %v673 = vmax.f32 %v465, %v611
    %v678 = vsel %vm446, %v511, %v504
    %v679 = vsel %vm448, %v518, %v678
    %v680 = vsel %vm450, %v525, %v679
    %v686 = vsel %vm446, %v658, %v651
    %v687 = vsel %vm448, %v665, %v686
    %v688 = vsel %vm450, %v672, %v687
    %v690 = vsel %vm402, %v680, %v688
    %vm691 = vcmask 257024
    %692 = vst.msk [vmem:[#allocation2] sm:$0xf] %vm691, %v690
    %693 = vst.msk [vmem:[#allocation4] sm:$0xf] %vm454, %v673
    // Predicated region
    $region42: #{mh_attention_forward.1} parent=1 // pred_check
      _
    $region43: #{mh_attention_forward.1} parent=1 // pred_check_branch
      %695 = sbr.rel (0) target = $region45
    $region44: #{mh_attention_forward.1} parent=1 // pred_region
      %s697 = ssub.s32 64, 64
      %698 = vsyncadd [#allocation3], %s697
      %s700 = sshll.u32 [#allocation2], 4
      %s701 = int_to_ptr.vmem [resolvable:$true] %s700
      %703 = dma.vmem_to_hbm [thread:$0]  %s701, 64, %s10, [#allocation3]
    $region45: #{mh_attention_forward.1} parent=1 // pred_fallthru
      _
    // Predicated region
    $region46: #{mh_attention_forward.1} parent=1 // pred_check
      _
    $region47: #{mh_attention_forward.1} parent=1 // pred_check_branch
      %705 = sbr.rel (0) target = $region49
    $region48: #{mh_attention_forward.1} parent=1 // pred_region
      %s707 = ssub.s32 64, 64
      %708 = vsyncadd [#allocation5], %s707
      %s710 = sshll.u32 [#allocation4], 4
      %s711 = int_to_ptr.vmem [resolvable:$true] %s710
      %713 = dma.vmem_to_hbm [thread:$0]  %s711, 64, %s11, [#allocation5]
    $region49: #{mh_attention_forward.1} parent=1 // pred_fallthru
      _
    // Predicated region
    $region50: #{mh_attention_forward.1} parent=1 // pred_check
      _
    $region51: #{mh_attention_forward.1} parent=1 // pred_check_branch
      %715 = sbr.rel (0) target = $region53
    $region52: #{mh_attention_forward.1} parent=1 // pred_region
      %716 = dma.done [#allocation3], 64
    $region53: #{mh_attention_forward.1} parent=1 // pred_fallthru
      _
    // Predicated region
    $region54: #{mh_attention_forward.1} parent=1 // pred_check
      _
    $region55: #{mh_attention_forward.1} parent=1 // pred_check_branch
      %718 = sbr.rel (0) target = $region57
    $region56: #{mh_attention_forward.1} parent=1 // pred_region
      %719 = dma.done [#allocation5], 64
    $region57: #{mh_attention_forward.1} parent=1 // pred_fallthru
      _
    %720 = vsyncpa [#allocation3], 1
    %721 = vsyncpa [#allocation5], 1

</llo_original>
